<compile_context>
chip_gen: v7x
topology: tpu7x:2x2x1
jax: 0.10.0
libtpu: 0.0.40
codegen_flags: <defaults>
</compile_context>

<pallas_src>
import functools

import jax
import jax.numpy as jnp
import numpy as np
from jax import lax
from jax.experimental import pallas as pl
from jax.experimental.pallas import tpu as pltpu


_INV_SQRT2 = 0.7071067811865476


def _gelu(x):
    # exact (erf) GELU, matching torch.nn.GELU() default (approximate='none')
    return 0.5 * x * (1.0 + lax.erf(x * _INV_SQRT2))


def _round_up(x, m):
    return ((x + m - 1) // m) * m


# ----------------------------------------------------------------------------
# Kernel: one block of B images per grid step.
#   x_ref     : (B, C, HW)      input block (unpadded, NC(HW) layout)
#   masks_ref : (2, TOT)        source-column masks over the padded row
#   w1_ref    : (C, 9C)         fused depthwise+pointwise+BN1 weight
#   b1_ref    : (C, 1)          BN1 shift
#   w2_ref    : (Cout, C)       BN2-scaled 1x1 linear weight
#   b2_ref    : (Cout, 1)       BN2 shift
#   out_ref   : (B, Cout, HW)
#   xpad_ref  : (B, C, TOT)     VMEM scratch: zero-padded flattened image
#   col_ref   : (9C, B*HW)      VMEM scratch: im2col tap stack
# ----------------------------------------------------------------------------
def light_unit_kernel(x_ref, masks_ref, w1_ref, b1_ref, w2_ref, b2_ref,
                      out_ref, xpad_ref, col_ref, *, W, LPAD):
    B, C, HW = x_ref.shape
    TOT = xpad_ref.shape[-1]

    mask_l = masks_ref[0:1, :]      # 0.0 at source image-column W-1 (dx=0 taps)
    mask_r = masks_ref[1:2, :]      # 0.0 at source image-column 0   (dx=2 taps)

    zl = jnp.zeros((C, LPAD), jnp.float32)
    zr = jnp.zeros((C, TOT - LPAD - HW), jnp.float32)

    # ---- build the im2col tap stack: col[t*C + c, b*HW + pos] --------------
    for b in range(B):
        # refresh pad regions every step (scratch is uninitialized on each
        # core's first step under megacore, so no @pl.when(first) gating).
        xpad_ref[b, :, 0:LPAD] = zl
        xpad_ref[b, :, LPAD + HW:TOT] = zr
        xpad_ref[b, :, LPAD:LPAD + HW] = x_ref[b]      # lane-tile-aligned store

        xp = xpad_ref[b]                   # (C, TOT)
        xp_l = xp * mask_l                 # source for taps reading column w-1
        xp_r = xp * mask_r                 # source for taps reading column w+1

        for dy in range(3):
            for dx in range(3):
                t = dy * 3 + dx
                off = LPAD + (dy - 1) * W + (dx - 1)   # static offset
                src = xp_l if dx == 0 else (xp_r if dx == 2 else xp)
                col_ref[t * C:(t + 1) * C, b * HW:(b + 1) * HW] = \
                    src[:, off:off + HW]

    col = col_ref[...]                                    # (9C, B*HW)

    # fused depthwise + pointwise conv + BN1 + GELU: one MXU matmul, K = 9C
    y = jnp.dot(w1_ref[...], col, preferred_element_type=jnp.float32)
    y = _gelu(y + b1_ref[...])

    # residual add: the centre-tap rows of the stack are exactly x
    y = y + col_ref[4 * C:5 * C, :]

    # 1x1 linear conv + BN2 + GELU
    z = jnp.dot(w2_ref[...], y, preferred_element_type=jnp.float32)
    z = _gelu(z + b2_ref[...])

    for b in range(B):
        out_ref[b] = z[:, b * HW:(b + 1) * HW].astype(out_ref.dtype)


# ----------------------------------------------------------------------------
# Per-step image-batch selection: largest divisor of N whose double-buffered
# blocks + scratch fit a VMEM budget, keeping >= 2 grid steps when N >= 2 so
# a "parallel" grid axis can split across v7x's two TensorCores.
# ----------------------------------------------------------------------------
def _pick_block_b(N, C, Cout, HW, TOT, budget_bytes=6 << 20):
    bytes_per_img = 4 * (2 * C * HW        # double-buffered input block
                         + 2 * Cout * HW   # double-buffered output block
                         + C * TOT         # padded-image scratch
                         + 9 * C * HW)     # im2col scratch
    max_b = max(1, budget_bytes // max(bytes_per_img, 1))
    best = 1
    for b in range(1, N + 1):
        if N % b != 0 or b > max_b:
            continue
        if N >= 2 and N // b < 2:
            continue
        best = b
    return best


# ----------------------------------------------------------------------------
# Wrapper
# ----------------------------------------------------------------------------
@jax.jit
def light_unit_forward(x_nchw, params):
    x = x_nchw.astype(jnp.float32)
    N, C, H, W = x.shape
    Cout = params["lin_w"].shape[0]
    HW = H * W

    # padded flattened-row geometry: >=2 zero rows on each side of the image,
    # with x stored at a lane-tile-aligned offset so all scratch stores are
    # aligned; only the shifted tap *reads* are unaligned value slices.
    LPAD = _round_up(2 * W, 128)
    RPAD = _round_up(W + 1, 128)
    TOT = LPAD + HW + RPAD

    B = _pick_block_b(N, C, Cout, HW, TOT)

    xf = x.reshape(N, C, HW)                # free reshape; no HBM pad pass

    # prefuse the BatchNorm scales and fold the depthwise conv into the first
    # pointwise matmul:  w1[o, t*C + c] = bn1_scale[o] * pw[o, c] * dw[c, t]
    dw = params["dw_w"].reshape(C, 9)                       # dw[c, t], t=dy*3+dx
    pw_s = params["pw_w"] * params["bn1_scale"][:, None]    # (C, C)
    w1 = jnp.einsum("oc,ct->otc", pw_s, dw).reshape(C, 9 * C)
    b1 = params["bn1_shift"].reshape(C, 1)
    w2 = params["lin_w"] * params["bn2_scale"][:, None]     # (Cout, C)
    b2 = params["bn2_shift"].reshape(Cout, 1)

    # source-column masks over the padded row (constant input, tiny DMA):
    #   row 0: zero where image-column == W-1   (used for all dx=0 taps)
    #   row 1: zero where image-column == 0     (used for all dx=2 taps)
    p = np.arange(TOT)
    colid = (p - LPAD) % W
    masks = jnp.asarray(
        np.stack([(colid != W - 1), (colid != 0)]).astype(np.float32))

    kernel = functools.partial(light_unit_kernel, W=W, LPAD=LPAD)

    out = pl.pallas_call(
        kernel,
        out_shape=jax.ShapeDtypeStruct((N, Cout, HW), jnp.float32),
        grid_spec=pltpu.PrefetchScalarGridSpec(
            num_scalar_prefetch=0,
            grid=(N // B,),
            in_specs=[
                pl.BlockSpec((B, C, HW), lambda n: (n, 0, 0)),
                pl.BlockSpec((2, TOT), lambda n: (0, 0)),
                pl.BlockSpec((C, 9 * C), lambda n: (0, 0)),
                pl.BlockSpec((C, 1), lambda n: (0, 0)),
                pl.BlockSpec((Cout, C), lambda n: (0, 0)),
                pl.BlockSpec((Cout, 1), lambda n: (0, 0)),
            ],
            out_specs=pl.BlockSpec((B, Cout, HW), lambda n: (n, 0, 0)),
            scratch_shapes=[
                pltpu.VMEM((B, C, TOT), jnp.float32),      # padded image rows
                pltpu.VMEM((9 * C, B * HW), jnp.float32),  # im2col tap stack
            ],
        ),
        compiler_params=pltpu.CompilerParams(
            dimension_semantics=("parallel",),
            vmem_limit_bytes=32 * 1024 * 1024),
    )(xf, masks, w1, b1, w2, b2)

    # free reshape: (N, Cout, H*W) is already NCHW up to splitting the last axis
    return out.reshape(N, Cout, H, W)


# ----------------------------------------------------------------------------
# Deterministic parameter initialization (shapes follow Light_unit.__init__)
# ----------------------------------------------------------------------------
def init_params(key, in_channels, out_channels, eps=1e-5):
    ks = jax.random.split(key, 11)
    # depthwise Conv2d(C, C, 3, groups=C, bias=False): torch (C,1,3,3) -> (C,3,3)
    dw_w = 0.1 * jax.random.normal(ks[0], (in_channels, 3, 3), jnp.float32)
    # pointwise Conv2d(C, C, 1, bias=False): torch (Cout,Cin,1,1) -> (Cout,Cin)
    pw_w = 0.1 * jax.random.normal(ks[1], (in_channels, in_channels), jnp.float32)
    # linear Conv2d(Cin, Cout, 1, bias=False): torch (Cout,Cin,1,1) -> (Cout,Cin)
    lin_w = 0.1 * jax.random.normal(ks[2], (out_channels, in_channels), jnp.float32)

    def bn(gk, bk, mk, vk, c):
        gamma = 1.0 + 0.1 * jax.random.normal(gk, (c,), jnp.float32)
        beta = 0.1 * jax.random.normal(bk, (c,), jnp.float32)
        mean = 0.1 * jax.random.normal(mk, (c,), jnp.float32)
        var = jnp.abs(jax.random.normal(vk, (c,), jnp.float32)) + 0.5
        scale = gamma / jnp.sqrt(var + eps)
        shift = beta - mean * scale
        return scale, shift

    bn1_scale, bn1_shift = bn(ks[3], ks[4], ks[5], ks[6], in_channels)
    bn2_scale, bn2_shift = bn(ks[7], ks[8], ks[9], ks[10], out_channels)

    return dict(dw_w=dw_w, pw_w=pw_w, lin_w=lin_w,
                bn1_scale=bn1_scale, bn1_shift=bn1_shift,
                bn2_scale=bn2_scale, bn2_shift=bn2_shift)


# ----------------------------------------------------------------------------
# Pure-JAX reference (for a correctness check)
# ----------------------------------------------------------------------------
def reference_forward(x_nchw, params):
    x = x_nchw.astype(jnp.float32)
    N, C, H, W = x.shape
    dw_kernel = params["dw_w"][:, None, :, :]          # (C,1,3,3) OIHW, groups=C
    y = lax.conv_general_dilated(
        x, dw_kernel, (1, 1), ((1, 1), (1, 1)),
        dimension_numbers=("NCHW", "OIHW", "NCHW"),
        feature_group_count=C)
    y = jnp.einsum("nchw,dc->ndhw", y, params["pw_w"])
    y = (y * params["bn1_scale"][None, :, None, None]
         + params["bn1_shift"][None, :, None, None])
    y = _gelu(y)
    y = x + y
    z = jnp.einsum("nchw,oc->nohw", y, params["lin_w"])
    z = (z * params["bn2_scale"][None, :, None, None]
         + params["bn2_shift"][None, :, None, None])
    z = _gelu(z)
    return z


if __name__ == "__main__":
    key = jax.random.PRNGKey(0)
    k_x, k_p = jax.random.split(key)

    N, C_in, C_out, H, W = 2, 8, 16, 16, 16
    x = jax.random.normal(k_x, (N, C_in, H, W), jnp.float32)
    params = init_params(k_p, C_in, C_out)

    out = jax.block_until_ready(light_unit_forward(x, params))
    ref = jax.block_until_ready(reference_forward(x, params))

    assert out.shape == (N, C_out, H, W)
    np.testing.assert_allclose(np.asarray(out), np.asarray(ref),
                               rtol=2e-3, atol=2e-3)

    print("KERNEL_OK")
</pallas_src>

<mosaic_0001>
module attributes {stable_mosaic.version = 11 : i64} {
  func.func @light_unit_kernel(%arg0: i32, %arg1: memref<1x8x256xf32, #tpu.memory_space<vmem>>, %arg2: memref<2x512xf32, #tpu.memory_space<vmem>>, %arg3: memref<8x72xf32, #tpu.memory_space<vmem>>, %arg4: memref<8x1xf32, #tpu.memory_space<vmem>>, %arg5: memref<16x8xf32, #tpu.memory_space<vmem>>, %arg6: memref<16x1xf32, #tpu.memory_space<vmem>>, %arg7: memref<1x16x256xf32, #tpu.memory_space<vmem>>, %arg8: memref<1x8x512xf32, #tpu.memory_space<vmem>>, %arg9: memref<72x256xf32, #tpu.memory_space<vmem>>) attributes {dimension_semantics = [#tpu.dimension_semantics<parallel>], iteration_bounds = array<i64: 2>, scalar_prefetch = 0 : i64, scratch_operands = 2 : i64, tpu.core_type = #tpu.core_type<tc>, window_params = [{transform_indices = @transform_0, window_bounds = array<i64: 1, 8, 256>}, {pipeline_mode = #tpu.pipeline_mode<synchronous>, transform_indices = @transform_1, window_bounds = array<i64: 2, 512>}, {pipeline_mode = #tpu.pipeline_mode<synchronous>, transform_indices = @transform_2, window_bounds = array<i64: 8, 72>}, {pipeline_mode = #tpu.pipeline_mode<synchronous>, transform_indices = @transform_3, window_bounds = array<i64: 8, 1>}, {pipeline_mode = #tpu.pipeline_mode<synchronous>, transform_indices = @transform_4, window_bounds = array<i64: 16, 8>}, {pipeline_mode = #tpu.pipeline_mode<synchronous>, transform_indices = @transform_5, window_bounds = array<i64: 16, 1>}, {transform_indices = @transform_6, window_bounds = array<i64: 1, 16, 256>}]} {
    %c0 = arith.constant 0 : index
    %c0_0 = arith.constant 0 : index
    %0 = vector.load %arg2[%c0, %c0_0] : memref<2x512xf32, #tpu.memory_space<vmem>>, vector<1x512xf32>
    %c1 = arith.constant 1 : index
    %c0_1 = arith.constant 0 : index
    %1 = vector.load %arg2[%c1, %c0_1] : memref<2x512xf32, #tpu.memory_space<vmem>>, vector<1x512xf32>
    %cst = arith.constant 0.000000e+00 : f32
    %2 = vector.broadcast %cst : f32 to vector<8x128xf32>
    %cst_2 = arith.constant 0.000000e+00 : f32
    %3 = vector.broadcast %cst_2 : f32 to vector<8x128xf32>
    %c0_3 = arith.constant 0 : index
    %c0_4 = arith.constant 0 : index
    %c0_5 = arith.constant 0 : index
    %4 = vector.load %arg8[%c0_3, %c0_4, %c0_5] : memref<1x8x512xf32, #tpu.memory_space<vmem>>, vector<1x8x128xf32>
    %5 = vector.shape_cast %4 : vector<1x8x128xf32> to vector<8x128xf32>
    %6 = vector.shape_cast %2 : vector<8x128xf32> to vector<1x8x128xf32>
    tpu.vector_store %arg8[%c0_3, %c0_4, %c0_5], %6 {strides = array<i32>} : memref<1x8x512xf32, #tpu.memory_space<vmem>>, vector<1x8x128xf32>,
    %c0_6 = arith.constant 0 : index
    %c0_7 = arith.constant 0 : index
    %c384 = arith.constant 384 : index
    %7 = vector.load %arg8[%c0_6, %c0_7, %c384] : memref<1x8x512xf32, #tpu.memory_space<vmem>>, vector<1x8x128xf32>
    %8 = vector.shape_cast %7 : vector<1x8x128xf32> to vector<8x128xf32>
    %9 = vector.shape_cast %3 : vector<8x128xf32> to vector<1x8x128xf32>
    tpu.vector_store %arg8[%c0_6, %c0_7, %c384], %9 {strides = array<i32>} : memref<1x8x512xf32, #tpu.memory_space<vmem>>, vector<1x8x128xf32>,
    %c0_8 = arith.constant 0 : index
    %c0_9 = arith.constant 0 : index
    %c0_10 = arith.constant 0 : index
    %10 = vector.load %arg1[%c0_8, %c0_9, %c0_10] : memref<1x8x256xf32, #tpu.memory_space<vmem>>, vector<1x8x256xf32>
    %11 = vector.shape_cast %10 : vector<1x8x256xf32> to vector<8x256xf32>
    %c0_11 = arith.constant 0 : index
    %c0_12 = arith.constant 0 : index
    %c128 = arith.constant 128 : index
    %12 = vector.load %arg8[%c0_11, %c0_12, %c128] : memref<1x8x512xf32, #tpu.memory_space<vmem>>, vector<1x8x256xf32>
    %13 = vector.shape_cast %12 : vector<1x8x256xf32> to vector<8x256xf32>
    %14 = vector.shape_cast %11 : vector<8x256xf32> to vector<1x8x256xf32>
    tpu.vector_store %arg8[%c0_11, %c0_12, %c128], %14 {strides = array<i32>} : memref<1x8x512xf32, #tpu.memory_space<vmem>>, vector<1x8x256xf32>,
    %c0_13 = arith.constant 0 : index
    %c0_14 = arith.constant 0 : index
    %c0_15 = arith.constant 0 : index
    %15 = vector.load %arg8[%c0_13, %c0_14, %c0_15] : memref<1x8x512xf32, #tpu.memory_space<vmem>>, vector<1x8x512xf32>
    %16 = vector.shape_cast %15 : vector<1x8x512xf32> to vector<8x512xf32>
    %17 = vector.broadcast %0 : vector<1x512xf32> to vector<8x512xf32>
    %18 = arith.mulf %16, %17 : vector<8x512xf32>
    %19 = vector.broadcast %1 : vector<1x512xf32> to vector<8x512xf32>
    %20 = arith.mulf %16, %19 : vector<8x512xf32>
    %21 = vector.extract_strided_slice %18 {offsets = [0, 111], sizes = [8, 256], strides = [1, 1]} : vector<8x512xf32> to vector<8x256xf32>
    %c0_16 = arith.constant 0 : index
    %c0_17 = arith.constant 0 : index
    %22 = vector.load %arg9[%c0_16, %c0_17] : memref<72x256xf32, #tpu.memory_space<vmem>>, vector<8x256xf32>
    tpu.vector_store %arg9[%c0_16, %c0_17], %21 {strides = array<i32>} : memref<72x256xf32, #tpu.memory_space<vmem>>, vector<8x256xf32>,
    %23 = vector.extract_strided_slice %16 {offsets = [0, 112], sizes = [8, 256], strides = [1, 1]} : vector<8x512xf32> to vector<8x256xf32>
    %c8 = arith.constant 8 : index
    %c0_18 = arith.constant 0 : index
    %24 = vector.load %arg9[%c8, %c0_18] : memref<72x256xf32, #tpu.memory_space<vmem>>, vector<8x256xf32>
    tpu.vector_store %arg9[%c8, %c0_18], %23 {strides = array<i32>} : memref<72x256xf32, #tpu.memory_space<vmem>>, vector<8x256xf32>,
    %25 = vector.extract_strided_slice %20 {offsets = [0, 113], sizes = [8, 256], strides = [1, 1]} : vector<8x512xf32> to vector<8x256xf32>
    %c16 = arith.constant 16 : index
    %c0_19 = arith.constant 0 : index
    %26 = vector.load %arg9[%c16, %c0_19] : memref<72x256xf32, #tpu.memory_space<vmem>>, vector<8x256xf32>
    tpu.vector_store %arg9[%c16, %c0_19], %25 {strides = array<i32>} : memref<72x256xf32, #tpu.memory_space<vmem>>, vector<8x256xf32>,
    %27 = vector.extract_strided_slice %18 {offsets = [0, 127], sizes = [8, 256], strides = [1, 1]} : vector<8x512xf32> to vector<8x256xf32>
    %c24 = arith.constant 24 : index
    %c0_20 = arith.constant 0 : index
    %28 = vector.load %arg9[%c24, %c0_20] : memref<72x256xf32, #tpu.memory_space<vmem>>, vector<8x256xf32>
    tpu.vector_store %arg9[%c24, %c0_20], %27 {strides = array<i32>} : memref<72x256xf32, #tpu.memory_space<vmem>>, vector<8x256xf32>,
    %29 = vector.extract_strided_slice %16 {offsets = [0, 128], sizes = [8, 256], strides = [1, 1]} : vector<8x512xf32> to vector<8x256xf32>
    %c32 = arith.constant 32 : index
    %c0_21 = arith.constant 0 : index
    %30 = vector.load %arg9[%c32, %c0_21] : memref<72x256xf32, #tpu.memory_space<vmem>>, vector<8x256xf32>
    tpu.vector_store %arg9[%c32, %c0_21], %29 {strides = array<i32>} : memref<72x256xf32, #tpu.memory_space<vmem>>, vector<8x256xf32>,
    %31 = vector.extract_strided_slice %20 {offsets = [0, 129], sizes = [8, 256], strides = [1, 1]} : vector<8x512xf32> to vector<8x256xf32>
    %c40 = arith.constant 40 : index
    %c0_22 = arith.constant 0 : index
    %32 = vector.load %arg9[%c40, %c0_22] : memref<72x256xf32, #tpu.memory_space<vmem>>, vector<8x256xf32>
    tpu.vector_store %arg9[%c40, %c0_22], %31 {strides = array<i32>} : memref<72x256xf32, #tpu.memory_space<vmem>>, vector<8x256xf32>,
    %33 = vector.extract_strided_slice %18 {offsets = [0, 143], sizes = [8, 256], strides = [1, 1]} : vector<8x512xf32> to vector<8x256xf32>
    %c48 = arith.constant 48 : index
    %c0_23 = arith.constant 0 : index
    %34 = vector.load %arg9[%c48, %c0_23] : memref<72x256xf32, #tpu.memory_space<vmem>>, vector<8x256xf32>
    tpu.vector_store %arg9[%c48, %c0_23], %33 {strides = array<i32>} : memref<72x256xf32, #tpu.memory_space<vmem>>, vector<8x256xf32>,
    %35 = vector.extract_strided_slice %16 {offsets = [0, 144], sizes = [8, 256], strides = [1, 1]} : vector<8x512xf32> to vector<8x256xf32>
    %c56 = arith.constant 56 : index
    %c0_24 = arith.constant 0 : index
    %36 = vector.load %arg9[%c56, %c0_24] : memref<72x256xf32, #tpu.memory_space<vmem>>, vector<8x256xf32>
    tpu.vector_store %arg9[%c56, %c0_24], %35 {strides = array<i32>} : memref<72x256xf32, #tpu.memory_space<vmem>>, vector<8x256xf32>,
    %37 = vector.extract_strided_slice %20 {offsets = [0, 145], sizes = [8, 256], strides = [1, 1]} : vector<8x512xf32> to vector<8x256xf32>
    %c64 = arith.constant 64 : index
    %c0_25 = arith.constant 0 : index
    %38 = vector.load %arg9[%c64, %c0_25] : memref<72x256xf32, #tpu.memory_space<vmem>>, vector<8x256xf32>
    tpu.vector_store %arg9[%c64, %c0_25], %37 {strides = array<i32>} : memref<72x256xf32, #tpu.memory_space<vmem>>, vector<8x256xf32>,
    %c0_26 = arith.constant 0 : index
    %c0_27 = arith.constant 0 : index
    %39 = vector.load %arg9[%c0_26, %c0_27] : memref<72x256xf32, #tpu.memory_space<vmem>>, vector<72x256xf32>
    %c0_28 = arith.constant 0 : index
    %c0_29 = arith.constant 0 : index
    %40 = vector.load %arg3[%c0_28, %c0_29] : memref<8x72xf32, #tpu.memory_space<vmem>>, vector<8x72xf32>
    %cst_30 = arith.constant dense<0.000000e+00> : vector<8x256xf32>
    %41 = tpu.matmul %40, %39, %cst_30 {dimension_numbers = #tpu.dot_dimension_numbers<[1], [0], [0], [1], [0, 0, 1, 1], [], []>} : vector<8x72xf32>, vector<72x256xf32>, vector<8x256xf32> -> vector<8x256xf32>
    %c0_31 = arith.constant 0 : index
    %c0_32 = arith.constant 0 : index
    %42 = vector.load %arg4[%c0_31, %c0_32] : memref<8x1xf32, #tpu.memory_space<vmem>>, vector<8x1xf32>
    %43 = vector.broadcast %42 : vector<8x1xf32> to vector<8x256xf32>
    %44 = arith.addf %41, %43 : vector<8x256xf32>
    %cst_33 = arith.constant 5.000000e-01 : f32
    %45 = vector.broadcast %cst_33 : f32 to vector<8x256xf32>
    %46 = arith.mulf %45, %44 : vector<8x256xf32>
    %cst_34 = arith.constant 0.707106769 : f32
    %47 = vector.broadcast %cst_34 : f32 to vector<8x256xf32>
    %48 = arith.mulf %44, %47 : vector<8x256xf32>
    %49 = math.erf %48 : vector<8x256xf32>
    %cst_35 = arith.constant 1.000000e+00 : f32
    %50 = vector.broadcast %cst_35 : f32 to vector<8x256xf32>
    %51 = arith.addf %50, %49 : vector<8x256xf32>
    %52 = arith.mulf %46, %51 : vector<8x256xf32>
    %c32_36 = arith.constant 32 : index
    %c0_37 = arith.constant 0 : index
    %53 = vector.load %arg9[%c32_36, %c0_37] : memref<72x256xf32, #tpu.memory_space<vmem>>, vector<8x256xf32>
    %54 = arith.addf %52, %53 : vector<8x256xf32>
    %c0_38 = arith.constant 0 : index
    %c0_39 = arith.constant 0 : index
    %55 = vector.load %arg5[%c0_38, %c0_39] : memref<16x8xf32, #tpu.memory_space<vmem>>, vector<16x8xf32>
    %cst_40 = arith.constant dense<0.000000e+00> : vector<16x256xf32>
    %56 = tpu.matmul %55, %54, %cst_40 {dimension_numbers = #tpu.dot_dimension_numbers<[1], [0], [0], [1], [0, 0, 1, 1], [], []>} : vector<16x8xf32>, vector<8x256xf32>, vector<16x256xf32> -> vector<16x256xf32>
    %c0_41 = arith.constant 0 : index
    %c0_42 = arith.constant 0 : index
    %57 = vector.load %arg6[%c0_41, %c0_42] : memref<16x1xf32, #tpu.memory_space<vmem>>, vector<16x1xf32>
    %58 = vector.broadcast %57 : vector<16x1xf32> to vector<16x256xf32>
    %59 = arith.addf %56, %58 : vector<16x256xf32>
    %cst_43 = arith.constant 5.000000e-01 : f32
    %60 = vector.broadcast %cst_43 : f32 to vector<16x256xf32>
    %61 = arith.mulf %60, %59 : vector<16x256xf32>
    %cst_44 = arith.constant 0.707106769 : f32
    %62 = vector.broadcast %cst_44 : f32 to vector<16x256xf32>
    %63 = arith.mulf %59, %62 : vector<16x256xf32>
    %64 = math.erf %63 : vector<16x256xf32>
    %cst_45 = arith.constant 1.000000e+00 : f32
    %65 = vector.broadcast %cst_45 : f32 to vector<16x256xf32>
    %66 = arith.addf %65, %64 : vector<16x256xf32>
    %67 = arith.mulf %61, %66 : vector<16x256xf32>
    %c0_46 = arith.constant 0 : index
    %c0_47 = arith.constant 0 : index
    %c0_48 = arith.constant 0 : index
    %68 = vector.load %arg7[%c0_46, %c0_47, %c0_48] : memref<1x16x256xf32, #tpu.memory_space<vmem>>, vector<1x16x256xf32>
    %69 = vector.shape_cast %68 : vector<1x16x256xf32> to vector<16x256xf32>
    %70 = vector.shape_cast %67 : vector<16x256xf32> to vector<1x16x256xf32>
    tpu.vector_store %arg7[%c0_46, %c0_47, %c0_48], %70 {strides = array<i32>} : memref<1x16x256xf32, #tpu.memory_space<vmem>>, vector<1x16x256xf32>,
    return
  }
  func.func @transform_0(%arg0: i32) -> (i32, i32, i32) {
    %c0_i32 = arith.constant 0 : i32
    %c0_i32_0 = arith.constant 0 : i32
    %c0_i32_1 = arith.constant 0 : i32
    return %arg0, %c0_i32, %c0_i32_0 : i32, i32, i32
  }
  func.func @transform_1(%arg0: i32) -> (i32, i32) {
    %c0_i32 = arith.constant 0 : i32
    %c0_i32_0 = arith.constant 0 : i32
    %c0_i32_1 = arith.constant 0 : i32
    return %c0_i32, %c0_i32_0 : i32, i32
  }
  func.func @transform_2(%arg0: i32) -> (i32, i32) {
    %c0_i32 = arith.constant 0 : i32
    %c0_i32_0 = arith.constant 0 : i32
    %c0_i32_1 = arith.constant 0 : i32
    return %c0_i32, %c0_i32_0 : i32, i32
  }
  func.func @transform_3(%arg0: i32) -> (i32, i32) {
    %c0_i32 = arith.constant 0 : i32
    %c0_i32_0 = arith.constant 0 : i32
    %c0_i32_1 = arith.constant 0 : i32
    return %c0_i32, %c0_i32_0 : i32, i32
  }
  func.func @transform_4(%arg0: i32) -> (i32, i32) {
    %c0_i32 = arith.constant 0 : i32
    %c0_i32_0 = arith.constant 0 : i32
    %c0_i32_1 = arith.constant 0 : i32
    return %c0_i32, %c0_i32_0 : i32, i32
  }
  func.func @transform_5(%arg0: i32) -> (i32, i32) {
    %c0_i32 = arith.constant 0 : i32
    %c0_i32_0 = arith.constant 0 : i32
    %c0_i32_1 = arith.constant 0 : i32
    return %c0_i32, %c0_i32_0 : i32, i32
  }
  func.func @transform_6(%arg0: i32) -> (i32, i32, i32) {
    %c0_i32 = arith.constant 0 : i32
    %c0_i32_0 = arith.constant 0 : i32
    %c0_i32_1 = arith.constant 0 : i32
    return %arg0, %c0_i32, %c0_i32_0 : i32, i32, i32
  }
}

</mosaic_0001>

<llo_original>
// kernel: light_unit_forward.1
$region0: #{light_unit_forward.1}
  #allocation0 [shape = 'u32[]', space=smem, size = 0x4, offset = 0x4, fixed_abs, tag = 'smem constant byte address 0x4 - core index']
  #allocation1 [shape = 'u32[144,128]{1,0:T(1,128)}', space=vmem, size = 0x12000, scoped, tag = 'internal scratch']
  #allocation2 [shape = 'f32[1,8,512]{2,1,0:T(8,128)}', space=vmem, size = 0x4000, scoped, tag = 'scratch operand']
  #allocation3 [shape = 'f32[72,256]{1,0:T(8,128)}', space=vmem, size = 0x12000, scoped, tag = 'scratch operand']
  %s0 = inlined_call_operand.vmem [shape: f32[2,8,256], index: 0, kind: input, shape index: {}]
  %s1 = inlined_call_operand.vmem [shape: f32[2,512], index: 1, kind: input, shape index: {}]
  %s2 = inlined_call_operand.vmem [shape: f32[8,72], index: 2, kind: input, shape index: {}]
  %s3 = inlined_call_operand.vmem [shape: f32[8,1], index: 3, kind: input, shape index: {}]
  %s4 = inlined_call_operand.vmem [shape: f32[16,8], index: 4, kind: input, shape index: {}]
  %s5 = inlined_call_operand.vmem [shape: f32[16,1], index: 5, kind: input, shape index: {}]
  %s6 = inlined_call_operand.vmem [shape: f32[2,16,256], index: 6, kind: output, shape index: {}]
  %s7 = sld [smem:[#allocation0]]
  $region57: #{light_unit_forward.1} parent=0
    _
  %s9 = ssub.s32 1, %s7
  %s10 = scalar_select 0, %s9, %s7
  loop: start=0, step=1, limit=4
  $region2: #{light_unit_forward.1} parent=0 // loop_pre_header
    _
  $region3: #{light_unit_forward.1} parent=0 // loop_header
    %s12 = sphi 0, %s16
    %p13 = scmp.ge.s32.totalorder %s12, 4
    %s22 = sphi 0, %s24
    %s25 = sphi 0, %s22
    %s26 = sphi 0, %s25
    %s42 = sphi 0, %s26
    %s46 = sphi 0, %s46
    %s48 = sphi 0, %s46
    %s49 = sphi 0, %s48
    %s63 = sphi 0, %s49
    %s67 = sphi 0, %s67
    %s69 = sphi 0, %s67
    %s70 = sphi 0, %s69
    %s84 = sphi 0, %s70
    %s88 = sphi 0, %s88
    %s90 = sphi 0, %s88
    %s91 = sphi 0, %s90
    %s105 = sphi 0, %s91
    %s109 = sphi 0, %s109
    %s111 = sphi 0, %s109
    %s112 = sphi 0, %s111
    %s126 = sphi 0, %s112
    %s130 = sphi 0, %s130
    %s132 = sphi 0, %s130
    %s133 = sphi 0, %s132
    %s147 = sphi 0, %s133
    %s153 = sphi 0, %s155
    %s156 = sphi 0, %s153
    %s157 = sphi 0, %s156
    %s173 = sphi 0, %s157
  $region4: #{light_unit_forward.1} parent=0 // loop_header_branch
    %15 = sbr.rel (%p13) target = $region8
  $region5: #{light_unit_forward.1} parent=0 // loop_body
    %s17 = ssub.s32 %s12, 1
    %s18 = ssub.s32 %s12, 2
    %s19 = sadd.s32 %s12, 1
    %s20 = ssub.s32 %s12, %s19
    %p21 = scmp.eq.s32.totalorder %s20, 0
    %s23 = sadd.s32 %s22, 1
    %s24 = scalar_select %p21, %s22, %s23
    %p27 = pneg %p21
    %p28 = scmp.eq.s32.totalorder %s12, 1
    %p29 = por %p27, %p28
    %p30 = scmp.ne.s32.totalorder %s22, %s25
    %p31 = scmp.eq.s32.totalorder %s12, 0
    %p32 = por %p30, %p31
    %p33 = scmp.ne.s32.totalorder %s22, %s25
    %p34 = scmp.eq.s32.totalorder %s17, 1
    %p35 = por %p33, %p34
    %p36 = scmp.ne.s32.totalorder %s25, %s26
    %p37 = scmp.eq.s32.totalorder %s17, 0
    %p38 = por %p36, %p37
    %p39 = scmp.ne.s32.totalorder %s25, %s26
    %p40 = scmp.eq.s32.totalorder %s18, 1
    %p41 = por %p39, %p40
    %p43 = scmp.ne.s32.totalorder %s26, %s42
    %p44 = scmp.eq.s32.totalorder %s18, 0
    %p45 = por %p43, %p44
    %s47 = sadd.s32 %s46, 1
    %p50 = scmp.eq.s32.totalorder %s12, 1
    %p51 = scmp.ne.s32.totalorder %s46, %s48
    %p52 = scmp.eq.s32.totalorder %s12, 0
    %p53 = por %p51, %p52
    %p54 = scmp.ne.s32.totalorder %s46, %s48
    %p55 = scmp.eq.s32.totalorder %s17, 1
    %p56 = por %p54, %p55
    %p57 = scmp.ne.s32.totalorder %s48, %s49
    %p58 = scmp.eq.s32.totalorder %s17, 0
    %p59 = por %p57, %p58
    %p60 = scmp.ne.s32.totalorder %s48, %s49
    %p61 = scmp.eq.s32.totalorder %s18, 1
    %p62 = por %p60, %p61
    %p64 = scmp.ne.s32.totalorder %s49, %s63
    %p65 = scmp.eq.s32.totalorder %s18, 0
    %p66 = por %p64, %p65
    %s68 = sadd.s32 %s67, 1
    %p71 = scmp.eq.s32.totalorder %s12, 1
    %p72 = scmp.ne.s32.totalorder %s67, %s69
    %p73 = scmp.eq.s32.totalorder %s12, 0
    %p74 = por %p72, %p73
    %p75 = scmp.ne.s32.totalorder %s67, %s69
    %p76 = scmp.eq.s32.totalorder %s17, 1
    %p77 = por %p75, %p76
    %p78 = scmp.ne.s32.totalorder %s69, %s70
    %p79 = scmp.eq.s32.totalorder %s17, 0
    %p80 = por %p78, %p79
    %p81 = scmp.ne.s32.totalorder %s69, %s70
    %p82 = scmp.eq.s32.totalorder %s18, 1
    %p83 = por %p81, %p82
    %p85 = scmp.ne.s32.totalorder %s70, %s84
    %p86 = scmp.eq.s32.totalorder %s18, 0
    %p87 = por %p85, %p86
    %s89 = sadd.s32 %s88, 1
    %p92 = scmp.eq.s32.totalorder %s12, 1
    %p93 = scmp.ne.s32.totalorder %s88, %s90
    %p94 = scmp.eq.s32.totalorder %s12, 0
    %p95 = por %p93, %p94
    %p96 = scmp.ne.s32.totalorder %s88, %s90
    %p97 = scmp.eq.s32.totalorder %s17, 1
    %p98 = por %p96, %p97
    %p99 = scmp.ne.s32.totalorder %s90, %s91
    %p100 = scmp.eq.s32.totalorder %s17, 0
    %p101 = por %p99, %p100
    %p102 = scmp.ne.s32.totalorder %s90, %s91
    %p103 = scmp.eq.s32.totalorder %s18, 1
    %p104 = por %p102, %p103
    %p106 = scmp.ne.s32.totalorder %s91, %s105
    %p107 = scmp.eq.s32.totalorder %s18, 0
    %p108 = por %p106, %p107
    %s110 = sadd.s32 %s109, 1
    %p113 = scmp.eq.s32.totalorder %s12, 1
    %p114 = scmp.ne.s32.totalorder %s109, %s111
    %p115 = scmp.eq.s32.totalorder %s12, 0
    %p116 = por %p114, %p115
    %p117 = scmp.ne.s32.totalorder %s109, %s111
    %p118 = scmp.eq.s32.totalorder %s17, 1
    %p119 = por %p117, %p118
    %p120 = scmp.ne.s32.totalorder %s111, %s112
    %p121 = scmp.eq.s32.totalorder %s17, 0
    %p122 = por %p120, %p121
    %p123 = scmp.ne.s32.totalorder %s111, %s112
    %p124 = scmp.eq.s32.totalorder %s18, 1
    %p125 = por %p123, %p124
    %p127 = scmp.ne.s32.totalorder %s112, %s126
    %p128 = scmp.eq.s32.totalorder %s18, 0
    %p129 = por %p127, %p128
    %s131 = sadd.s32 %s130, 1
    %p134 = scmp.eq.s32.totalorder %s12, 1
    %p135 = scmp.ne.s32.totalorder %s130, %s132
    %p136 = scmp.eq.s32.totalorder %s12, 0
    %p137 = por %p135, %p136
    %p138 = scmp.ne.s32.totalorder %s130, %s132
    %p139 = scmp.eq.s32.totalorder %s17, 1
    %p140 = por %p138, %p139
    %p141 = scmp.ne.s32.totalorder %s132, %s133
    %p142 = scmp.eq.s32.totalorder %s17, 0
    %p143 = por %p141, %p142
    %p144 = scmp.ne.s32.totalorder %s132, %s133
    %p145 = scmp.eq.s32.totalorder %s18, 1
    %p146 = por %p144, %p145
    %p148 = scmp.ne.s32.totalorder %s133, %s147
    %p149 = scmp.eq.s32.totalorder %s18, 0
    %p150 = por %p148, %p149
    %s151 = ssub.s32 %s12, %s19
    %p152 = scmp.eq.s32.totalorder %s151, 0
    %s154 = sadd.s32 %s153, 1
    %s155 = scalar_select %p152, %s153, %s154
    %p158 = pneg %p152
    %p159 = scmp.eq.s32.totalorder %s12, 1
    %p160 = por %p158, %p159
    %p161 = scmp.ne.s32.totalorder %s153, %s156
    %p162 = scmp.eq.s32.totalorder %s12, 0
    %p163 = por %p161, %p162
    %p164 = scmp.ne.s32.totalorder %s153, %s156
    %p165 = scmp.eq.s32.totalorder %s17, 1
    %p166 = por %p164, %p165
    %p167 = scmp.ne.s32.totalorder %s156, %s157
    %p168 = scmp.eq.s32.totalorder %s17, 0
    %p169 = por %p167, %p168
    %p170 = scmp.ne.s32.totalorder %s156, %s157
    %p171 = scmp.eq.s32.totalorder %s18, 1
    %p172 = por %p170, %p171
    %p174 = scmp.ne.s32.totalorder %s157, %s173
    %p175 = scmp.eq.s32.totalorder %s18, 0
    %p176 = por %p174, %p175
    %p177 = scmp.le.s32.totalorder 1, %s12
    %p178 = scmp.lt.s32.totalorder %s12, 3
    %p179 = pnand %p177, %p178
    %p180 = pneg %p179
    // Predicated region
    $region9: #{light_unit_forward.1} parent=5 // pred_check
      _
    $region10: #{light_unit_forward.1} parent=5 // pred_check_branch
      %182 = sbr.rel (%p179) target = $region12
    $region11: #{light_unit_forward.1} parent=5 // pred_region
      %s183 = ssub.s32 %s12, 1
      // Predicated region
      $region13: #{light_unit_forward.1} parent=11 // pred_check
        %p184 = pneg %p59
      $region14: #{light_unit_forward.1} parent=11 // pred_check_branch
        %186 = sbr.rel (%p184) target = $region16
      $region15: #{light_unit_forward.1} parent=11 // pred_region
        _
      $region16: #{light_unit_forward.1} parent=11 // pred_fallthru
        _
      // Predicated region
      $region17: #{light_unit_forward.1} parent=11 // pred_check
        %p187 = pneg %p80
      $region18: #{light_unit_forward.1} parent=11 // pred_check_branch
        %189 = sbr.rel (%p187) target = $region20
      $region19: #{light_unit_forward.1} parent=11 // pred_region
        _
      $region20: #{light_unit_forward.1} parent=11 // pred_fallthru
        _
      // Predicated region
      $region21: #{light_unit_forward.1} parent=11 // pred_check
        %p190 = pneg %p101
      $region22: #{light_unit_forward.1} parent=11 // pred_check_branch
        %192 = sbr.rel (%p190) target = $region24
      $region23: #{light_unit_forward.1} parent=11 // pred_region
        _
      $region24: #{light_unit_forward.1} parent=11 // pred_fallthru
        _
      // Predicated region
      $region25: #{light_unit_forward.1} parent=11 // pred_check
        %p193 = pneg %p122
      $region26: #{light_unit_forward.1} parent=11 // pred_check_branch
        %195 = sbr.rel (%p193) target = $region28
      $region27: #{light_unit_forward.1} parent=11 // pred_region
        _
      $region28: #{light_unit_forward.1} parent=11 // pred_fallthru
        _
      // Predicated region
      $region29: #{light_unit_forward.1} parent=11 // pred_check
        %p196 = pneg %p143
      $region30: #{light_unit_forward.1} parent=11 // pred_check_branch
        %198 = sbr.rel (%p196) target = $region32
      $region31: #{light_unit_forward.1} parent=11 // pred_region
        _
      $region32: #{light_unit_forward.1} parent=11 // pred_fallthru
        _
    $region12: #{light_unit_forward.1} parent=5 // pred_fallthru
      _
    %p199 = scmp.lt.s32.totalorder %s12, 2
    // Predicated region
    $region33: #{light_unit_forward.1} parent=5 // pred_check
      %p200 = pneg %p199
    $region34: #{light_unit_forward.1} parent=5 // pred_check_branch
      %202 = sbr.rel (%p200) target = $region36
    $region35: #{light_unit_forward.1} parent=5 // pred_region
      // Predicated region
      $region37: #{light_unit_forward.1} parent=35 // pred_check
        %p203 = pneg %p32
      $region38: #{light_unit_forward.1} parent=35 // pred_check_branch
        %205 = sbr.rel (%p203) target = $region40
      $region39: #{light_unit_forward.1} parent=35 // pred_region
        %p206 = scmp.lt.s32.totalorder %s12, 1
        %s207 = scalar_select %p206, %s12, 1
        %s208 = smul.addr %s207, 2
        %s209 = smul.addr %s208, 8
        %s210 = scalar_lea.vmem %s0, %s209
      $region40: #{light_unit_forward.1} parent=35 // pred_fallthru
        _
    $region36: #{light_unit_forward.1} parent=5 // pred_fallthru
      _
    %p211 = scmp.le.s32.totalorder 1, %s12
    %p212 = scmp.lt.s32.totalorder %s12, 3
    %p213 = pnand %p211, %p212
    %p214 = pneg %p213
    // Predicated region
    $region41: #{light_unit_forward.1} parent=5 // pred_check
      _
    $region42: #{light_unit_forward.1} parent=5 // pred_check_branch
      %216 = sbr.rel (%p213) target = $region44
    $region43: #{light_unit_forward.1} parent=5 // pred_region
      %s217 = ssub.s32 %s12, 1
      %p218 = scmp.lt.s32.totalorder %s17, 1
      %s219 = scalar_select %p218, %s17, 1
      %s220 = smul.addr %s219, 2
      %s221 = smul.addr %s220, 8
      %s222 = scalar_lea.vmem %s0, %s221
      %p223 = pneg %p38
      %p224 = pneg %p35
      %p225 = pneg %p59
      %p226 = pneg %p56
      %p227 = pneg %p80
      %p228 = pneg %p77
      %p229 = pneg %p101
      %p230 = pneg %p98
      %p231 = pneg %p122
      %p232 = pneg %p119
      %p233 = pneg %p143
      %p234 = pneg %p140
      %p235 = pneg %p169
      %p236 = pneg %p166
      %p237 = scmp.lt.s32.totalorder %s17, 1
      %s238 = scalar_select %p237, %s17, 1
      %s239 = smul.addr %s238, 4
      %s240 = smul.addr %s239, 8
      %s241 = scalar_lea.vmem %s6, %s240
      %p242 = scmp.lt.s32.totalorder %s17, 1
      %s243 = scalar_select %p242, %s17, 1
      %s244 = smul.addr %s243, 2
      %s245 = smul.addr %s244, 8
      %s246 = scalar_lea.vmem %s0, %s245
      %p247 = scmp.lt.s32.totalorder %s17, 1
      %s248 = scalar_select %p247, %s17, 1
      %s249 = smul.addr %s248, 4
      %s250 = smul.addr %s249, 8
      %s251 = scalar_lea.vmem %s6, %s250
      %v252 = vld [vmem:[%s1] ss:$2 sm:$0xf]
      %s253 = scalar_lea.vmem %s1, 1
      %v254 = vld [vmem:[%s253] ss:$2 sm:$0xf]
      %255 = vst [vmem:[#allocation2] sm:$0xff] 0.0
      %256 = vst [vmem:[#allocation2 + $0x18] sm:$0xff] 0.0
      %v257 = vld [vmem:[%s246] sm:$0xff]
      %v258 = vld [vmem:[%s246 + $0x8] sm:$0xff]
      %259 = vst [vmem:[#allocation2 + $0x8] sm:$0xff] %v257
      %260 = vst [vmem:[#allocation2 + $0x10] sm:$0xff] %v258
      %v261 = vld [vmem:[#allocation2] sm:$0xff]
      %v262 = vld [vmem:[#allocation2 + $0x8] sm:$0xff]
      %v263 = vld [vmem:[#allocation2 + $0x10] sm:$0xff]
      %v264 = vld [vmem:[#allocation2 + $0x18] sm:$0xff]
      %v266 = vlaneseq
      %v267 = vshrl.u32 %v266, 7
      %v268 = vsub.s32 0, %v267
      %v269 = vrot.slane %v252, %v268
      %v270 = vlaneseq
      %v271 = vshrl.u32 %v270, 7
      %v272 = vsub.s32 1, %v271
      %v273 = vrot.slane %v252, %v272
      %v274 = vlaneseq
      %v275 = vshrl.u32 %v274, 7
      %v276 = vsub.s32 2, %v275
      %v277 = vrot.slane %v252, %v276
      %v278 = vlaneseq
      %v279 = vshrl.u32 %v278, 7
      %v280 = vsub.s32 3, %v279
      %v281 = vrot.slane %v252, %v280
      %v286 = vmul.f32 %v261, %v269
      %v287 = vmul.f32 %v262, %v273
      %v288 = vmul.f32 %v263, %v277
      %v289 = vmul.f32 %v264, %v281
      %v291 = vlaneseq
      %v292 = vshrl.u32 %v291, 7
      %v293 = vsub.s32 0, %v292
      %v294 = vrot.slane %v254, %v293
      %v295 = vlaneseq
      %v296 = vshrl.u32 %v295, 7
      %v297 = vsub.s32 1, %v296
      %v298 = vrot.slane %v254, %v297
      %v299 = vlaneseq
      %v300 = vshrl.u32 %v299, 7
      %v301 = vsub.s32 2, %v300
      %v302 = vrot.slane %v254, %v301
      %v303 = vlaneseq
      %v304 = vshrl.u32 %v303, 7
      %v305 = vsub.s32 3, %v304
      %v306 = vrot.slane %v254, %v305
      %v311 = vmul.f32 %v261, %v294
      %v312 = vmul.f32 %v262, %v298
      %v313 = vmul.f32 %v263, %v302
      %v314 = vmul.f32 %v264, %v306
      %318 = vrot.lane.b32.xlu0 %v286, 17
      %v319 = vpop.permute.xlu0 %318
      %320 = vrot.lane.b32.xlu0 %v287, 17
      %v321 = vpop.permute.xlu0 %320
      %322 = vrot.lane.b32.xlu0 %v288, 17
      %v323 = vpop.permute.xlu0 %322
      %vm324 = vcmask 138240
      %v325 = vsel %vm324, %v319, %v321
      %v326 = vsel %vm324, %v321, %v323
      %329 = vst [vmem:[#allocation3] sm:$0xff] %v325
      %330 = vst [vmem:[#allocation3 + $0x8] sm:$0xff] %v326
      %334 = vrot.lane.b32.xlu0 %v261, 16
      %v335 = vpop.permute.xlu0 %334
      %336 = vrot.lane.b32.xlu0 %v262, 16
      %v337 = vpop.permute.xlu0 %336
      %338 = vrot.lane.b32.xlu0 %v263, 16
      %v339 = vpop.permute.xlu0 %338
      %vm340 = vcmask 130048
      %v341 = vsel %vm340, %v335, %v337
      %v342 = vsel %vm340, %v337, %v339
      %345 = vst [vmem:[#allocation3 + $0x10] sm:$0xff] %v341
      %346 = vst [vmem:[#allocation3 + $0x18] sm:$0xff] %v342
      %350 = vrot.lane.b32.xlu0 %v311, 15
      %v351 = vpop.permute.xlu0 %350
      %352 = vrot.lane.b32.xlu0 %v312, 15
      %v353 = vpop.permute.xlu0 %352
      %354 = vrot.lane.b32.xlu0 %v313, 15
      %v355 = vpop.permute.xlu0 %354
      %vm356 = vcmask 121856
      %v357 = vsel %vm356, %v351, %v353
      %v358 = vsel %vm356, %v353, %v355
      %361 = vst [vmem:[#allocation3 + $0x20] sm:$0xff] %v357
      %362 = vst [vmem:[#allocation3 + $0x28] sm:$0xff] %v358
      %363 = vrot.lane.b32.xlu0 %v286, 1
      %v364 = vpop.permute.xlu0 %363
      %365 = vrot.lane.b32.xlu0 %v287, 1
      %v366 = vpop.permute.xlu0 %365
      %367 = vrot.lane.b32.xlu0 %v288, 1
      %v368 = vpop.permute.xlu0 %367
      %vm369 = vcmask 7168
      %v370 = vsel %vm369, %v364, %v366
      %v371 = vsel %vm369, %v366, %v368
      %374 = vst [vmem:[#allocation3 + $0x30] sm:$0xff] %v370
      %375 = vst [vmem:[#allocation3 + $0x38] sm:$0xff] %v371
      %376 = vst [vmem:[#allocation3 + $0x40] sm:$0xff] %v262
      %377 = vst [vmem:[#allocation3 + $0x48] sm:$0xff] %v263
      %379 = vrot.lane.b32.xlu0 %v312, 127
      %v380 = vpop.permute.xlu0 %379
      %381 = vrot.lane.b32.xlu0 %v313, 127
      %v382 = vpop.permute.xlu0 %381
      %383 = vrot.lane.b32.xlu0 %v314, 127
      %v384 = vpop.permute.xlu0 %383
      %vm385 = vcmask 1039360
      %v386 = vsel %vm385, %v380, %v382
      %v387 = vsel %vm385, %v382, %v384
      %390 = vst [vmem:[#allocation3 + $0x50] sm:$0xff] %v386
      %391 = vst [vmem:[#allocation3 + $0x58] sm:$0xff] %v387
      %393 = vrot.lane.b32.xlu0 %v287, 113
      %v394 = vpop.permute.xlu0 %393
      %395 = vrot.lane.b32.xlu0 %v288, 113
      %v396 = vpop.permute.xlu0 %395
      %397 = vrot.lane.b32.xlu0 %v289, 113
      %v398 = vpop.permute.xlu0 %397
      %vm399 = vcmask 924672
      %v400 = vsel %vm399, %v394, %v396
      %v401 = vsel %vm399, %v396, %v398
      %404 = vst [vmem:[#allocation3 + $0x60] sm:$0xff] %v400
      %405 = vst [vmem:[#allocation3 + $0x68] sm:$0xff] %v401
      %407 = vrot.lane.b32.xlu0 %v262, 112
      %v408 = vpop.permute.xlu0 %407
      %409 = vrot.lane.b32.xlu0 %v263, 112
      %v410 = vpop.permute.xlu0 %409
      %411 = vrot.lane.b32.xlu0 %v264, 112
      %v412 = vpop.permute.xlu0 %411
      %vm413 = vcmask 916480
      %v414 = vsel %vm413, %v408, %v410
      %v415 = vsel %vm413, %v410, %v412
      %418 = vst [vmem:[#allocation3 + $0x70] sm:$0xff] %v414
      %419 = vst [vmem:[#allocation3 + $0x78] sm:$0xff] %v415
      %420 = vrot.lane.b32.xlu0 %v312, 111
      %v421 = vpop.permute.xlu0 %420
      %422 = vrot.lane.b32.xlu0 %v313, 111
      %v423 = vpop.permute.xlu0 %422
      %424 = vrot.lane.b32.xlu0 %v314, 111
      %v425 = vpop.permute.xlu0 %424
      %vm426 = vcmask 908288
      %v427 = vsel %vm426, %v421, %v423
      %v428 = vsel %vm426, %v423, %v425
      %431 = vst [vmem:[#allocation3 + $0x80] sm:$0xff] %v427
      %432 = vst [vmem:[#allocation3 + $0x88] sm:$0xff] %v428
      %v433 = vld [vmem:[#allocation3] sm:$0xff]
      %v434 = vld [vmem:[#allocation3 + $0x8] sm:$0xff]
      %v435 = vld [vmem:[#allocation3 + $0x10] sm:$0xff]
      %v436 = vld [vmem:[#allocation3 + $0x18] sm:$0xff]
      %v437 = vld [vmem:[#allocation3 + $0x20] sm:$0xff]
      %v438 = vld [vmem:[#allocation3 + $0x28] sm:$0xff]
      %v439 = vld [vmem:[#allocation3 + $0x30] sm:$0xff]
      %v440 = vld [vmem:[#allocation3 + $0x38] sm:$0xff]
      %v441 = vld [vmem:[#allocation3 + $0x40] sm:$0xff]
      %v442 = vld [vmem:[#allocation3 + $0x48] sm:$0xff]
      %v443 = vld [vmem:[#allocation3 + $0x50] sm:$0xff]
      %v444 = vld [vmem:[#allocation3 + $0x58] sm:$0xff]
      %v445 = vld [vmem:[#allocation3 + $0x60] sm:$0xff]
      %v446 = vld [vmem:[#allocation3 + $0x68] sm:$0xff]
      %v447 = vld [vmem:[#allocation3 + $0x70] sm:$0xff]
      %v448 = vld [vmem:[#allocation3 + $0x78] sm:$0xff]
      %v449 = vld [vmem:[#allocation3 + $0x80] sm:$0xff]
      %v450 = vld [vmem:[#allocation3 + $0x88] sm:$0xff]
      %v451 = vld [vmem:[%s2] sm:$0xff]
      %v452 = vld [vmem:[%s3] sm:$0xff]
      %454 = vset.pattern.permute.xlu0 0
      %455 = vperm.xlu0 %454, %v452
      %v456 = vpop.permute.xlu0 %455
      %vm458 = vcmask 588800
      %v460 = vsel %vm458, %v451, 0
      %462 = vmatprep.subr.mxu0 %v434
      %463 = vmatpush1.msra.mxu0 %v433
      %464 = vmatprep.subr.mxu0 %v436
      %465 = vmatpush1.msra.mxu0 %v435
      %466 = vmatprep.subr.mxu0 %v438
      %467 = vmatpush1.msra.mxu0 %v437
      %468 = vmatprep.subr.mxu0 %v440
      %469 = vmatpush1.msra.mxu0 %v439
      %470 = vmatprep.subr.mxu0 %v442
      %471 = vmatpush1.msra.mxu0 %v441
      %472 = vmatprep.subr.mxu0 %v444
      %473 = vmatpush1.msra.mxu0 %v443
      %474 = vmatprep.subr.mxu0 %v446
      %475 = vmatpush1.msra.mxu0 %v445
      %476 = vmatprep.subr.mxu0 %v448
      %477 = vmatpush1.msra.mxu0 %v447
      %478 = vmatprep.subr.mxu0 %v450
      %479 = vmatpush1.msra.mxu0 %v449
      %480 = vmatprep.subr.mxu0 0.0
      %481 = vmatpush1.msra.mxu0 0.0
      %482 = vmatprep.subr.mxu0 0.0
      %483 = vmatpush1.msra.mxu0 0.0
      %484 = vmatprep.subr.mxu0 0.0
      %485 = vmatpush1.msra.mxu0 0.0
      %486 = vmatprep.subr.mxu0 0.0
      %487 = vmatpush1.msra.mxu0 0.0
      %488 = vmatprep.subr.mxu0 0.0
      %489 = vmatpush1.msra.mxu0 0.0
      %490 = vmatprep.subr.mxu0 0.0
      %491 = vmatpush1.msra.mxu0 0.0
      %492 = vmatprep.subr.mxu0 0.0
      %493 = vmatpush1.msra.mxu0 0.0
      %494 = vmatprep.subr.mxu0 0.0
      %495 = vmatpush1.msra.mxu0 0.0
      %496 = vmatprep.subr.mxu0 0.0
      %497 = vmatpush1.msra.mxu0 0.0
      %498 = vmatprep.subr.mxu0 0.0
      %499 = vmatpush1.msra.mxu0 0.0
      %500 = vmatprep.subr.mxu0 0.0
      %501 = vmatpush1.msra.mxu0 0.0
      %502 = vmatprep.subr.mxu0 0.0
      %503 = vmatpush1.msra.mxu0 0.0
      %504 = vmatprep.subr.mxu0 0.0
      %505 = vmatpush1.msra.mxu0 0.0
      %506 = vmatprep.subr.mxu0 0.0
      %507 = vmatpush1.msra.mxu0 0.0
      %508 = vmatprep.subr.mxu0 0.0
      %509 = vmatpush1.msra.mxu0 0.0
      %510 = vmatprep.subr.mxu0 0.0
      %511 = vmatpush1.msra.mxu0 0.0
      %512 = vmatprep.subr.mxu0 0.0
      %513 = vmatpush1.msra.mxu0 0.0
      %514 = vmatprep.subr.mxu0 0.0
      %515 = vmatpush1.msra.mxu0 0.0
      %516 = vmatprep.subr.mxu0 0.0
      %517 = vmatpush1.msra.mxu0 0.0
      %518 = vmatprep.subr.mxu0 0.0
      %519 = vmatpush1.msra.mxu0 0.0
      %520 = vmatprep.subr.mxu0 0.0
      %521 = vmatpush1.msra.mxu0 0.0
      %522 = vmatprep.subr.mxu0 0.0
      %523 = vmatpush1.msra.mxu0 0.0
      %524 = vmatprep.subr.mxu0 0.0
      %525 = vmatpush1.msra.mxu0 0.0
      %526 = vmatprep.mubr.f32.mxu0 0.0
      %527 = vmatmul.mubr.f32.gmra.mrb[0].mxu0 %v460
      %v528 = vpop.f32.mrb[0].mxu0
      %v529 = vadd.f32 %v456, %v528
      %v530 = vpop.f32.mrb[0].mxu0
      %v531 = vadd.f32 %v456, %v530
      %532 = vdwg.mxu0
      %v533 = vmul.f32 %v529, 0.5
      %v534 = vmul.f32 %v531, 0.5
      %v535 = vmul.f32 %v529, 0.70710677
      %v536 = vmul.f32 %v531, 0.70710677
      %v537 = verf.f32.pop %v535
      %v538 = verf.f32.pop %v536
      %v539 = vadd.f32 %v537, 1.0
      %v540 = vadd.f32 %v538, 1.0
      %v541 = vmul.f32 %v533, %v539
      %v542 = vmul.f32 %v534, %v540
      %v543 = vld [vmem:[#allocation3 + $0x40] sm:$0xff]
      %v544 = vld [vmem:[#allocation3 + $0x48] sm:$0xff]
      %v545 = vadd.f32 %v541, %v543
      %v546 = vadd.f32 %v542, %v544
      %v547 = vld [vmem:[%s4] sm:$0xff]
      %v548 = vld [vmem:[%s4 + $0x8] sm:$0xff]
      %v549 = vld [vmem:[%s5] sm:$0xff]
      %v550 = vld [vmem:[%s5 + $0x8] sm:$0xff]
      %552 = vset.pattern.permute.xlu0 0
      %553 = vperm.xlu0 %552, %v549
      %v554 = vpop.permute.xlu0 %553
      %557 = vset.pattern.permute.xlu0 0
      %558 = vperm.xlu0 %557, %v550
      %v559 = vpop.permute.xlu0 %558
      %vm561 = vcmask 64512
      %v563 = vsel %vm561, %v547, 0
      %v566 = vsel %vm561, %v548, 0
      %568 = vmatprep.subr.mxu0 %v546
      %569 = vmatpush1.msra.mxu0 %v545
      %570 = vmatprep.subr.mxu0 0.0
      %571 = vmatpush1.msra.mxu0 0.0
      %572 = vmatprep.subr.mxu0 0.0
      %573 = vmatpush1.msra.mxu0 0.0
      %574 = vmatprep.subr.mxu0 0.0
      %575 = vmatpush1.msra.mxu0 0.0
      %576 = vmatprep.subr.mxu0 0.0
      %577 = vmatpush1.msra.mxu0 0.0
      %578 = vmatprep.subr.mxu0 0.0
      %579 = vmatpush1.msra.mxu0 0.0
      %580 = vmatprep.subr.mxu0 0.0
      %581 = vmatpush1.msra.mxu0 0.0
      %582 = vmatprep.subr.mxu0 0.0
      %583 = vmatpush1.msra.mxu0 0.0
      %584 = vmatprep.subr.mxu0 0.0
      %585 = vmatpush1.msra.mxu0 0.0
      %586 = vmatprep.subr.mxu0 0.0
      %587 = vmatpush1.msra.mxu0 0.0
      %588 = vmatprep.subr.mxu0 0.0
      %589 = vmatpush1.msra.mxu0 0.0
      %590 = vmatprep.subr.mxu0 0.0
      %591 = vmatpush1.msra.mxu0 0.0
      %592 = vmatprep.subr.mxu0 0.0
      %593 = vmatpush1.msra.mxu0 0.0
      %594 = vmatprep.subr.mxu0 0.0
      %595 = vmatpush1.msra.mxu0 0.0
      %596 = vmatprep.subr.mxu0 0.0
      %597 = vmatpush1.msra.mxu0 0.0
      %598 = vmatprep.subr.mxu0 0.0
      %599 = vmatpush1.msra.mxu0 0.0
      %600 = vmatprep.subr.mxu0 0.0
      %601 = vmatpush1.msra.mxu0 0.0
      %602 = vmatprep.subr.mxu0 0.0
      %603 = vmatpush1.msra.mxu0 0.0
      %604 = vmatprep.subr.mxu0 0.0
      %605 = vmatpush1.msra.mxu0 0.0
      %606 = vmatprep.subr.mxu0 0.0
      %607 = vmatpush1.msra.mxu0 0.0
      %608 = vmatprep.subr.mxu0 0.0
      %609 = vmatpush1.msra.mxu0 0.0
      %610 = vmatprep.subr.mxu0 0.0
      %611 = vmatpush1.msra.mxu0 0.0
      %612 = vmatprep.subr.mxu0 0.0
      %613 = vmatpush1.msra.mxu0 0.0
      %614 = vmatprep.subr.mxu0 0.0
      %615 = vmatpush1.msra.mxu0 0.0
      %616 = vmatprep.subr.mxu0 0.0
      %617 = vmatpush1.msra.mxu0 0.0
      %618 = vmatprep.subr.mxu0 0.0
      %619 = vmatpush1.msra.mxu0 0.0
      %620 = vmatprep.subr.mxu0 0.0
      %621 = vmatpush1.msra.mxu0 0.0
      %622 = vmatprep.subr.mxu0 0.0
      %623 = vmatpush1.msra.mxu0 0.0
      %624 = vmatprep.subr.mxu0 0.0
      %625 = vmatpush1.msra.mxu0 0.0
      %626 = vmatprep.subr.mxu0 0.0
      %627 = vmatpush1.msra.mxu0 0.0
      %628 = vmatprep.subr.mxu0 0.0
      %629 = vmatpush1.msra.mxu0 0.0
      %630 = vmatprep.subr.mxu0 0.0
      %631 = vmatpush1.msra.mxu0 0.0
      %632 = vmatprep.mubr.f32.mxu0 0.0
      %633 = vmatmul.mubr.f32.gmra.mrb[0].mxu0 %v563
      %v634 = vpop.f32.mrb[0].mxu0
      %v635 = vadd.f32 %v554, %v634
      %v636 = vpop.f32.mrb[0].mxu0
      %v637 = vadd.f32 %v554, %v636
      %638 = vmatprep.mubr.f32.mxu0 0.0
      %639 = vmatmul.mubr.f32.gmra.mrb[0].mxu0 %v566
      %v640 = vpop.f32.mrb[0].mxu0
      %v641 = vadd.f32 %v559, %v640
      %v642 = vpop.f32.mrb[0].mxu0
      %v643 = vadd.f32 %v559, %v642
      %644 = vdwg.mxu0
      %v645 = vmul.f32 %v635, 0.5
      %v646 = vmul.f32 %v637, 0.5
      %v647 = vmul.f32 %v641, 0.5
      %v648 = vmul.f32 %v643, 0.5
      %v649 = vmul.f32 %v635, 0.70710677
      %v650 = vmul.f32 %v637, 0.70710677
      %v651 = vmul.f32 %v641, 0.70710677
      %v652 = vmul.f32 %v643, 0.70710677
      %v653 = verf.f32.pop %v649
      %v654 = verf.f32.pop %v650
      %v655 = verf.f32.pop %v651
      %v656 = verf.f32.pop %v652
      %v657 = vadd.f32 %v653, 1.0
      %v658 = vadd.f32 %v654, 1.0
      %v659 = vadd.f32 %v655, 1.0
      %v660 = vadd.f32 %v656, 1.0
      %v661 = vmul.f32 %v645, %v657
      %v662 = vmul.f32 %v646, %v658
      %v663 = vmul.f32 %v647, %v659
      %v664 = vmul.f32 %v648, %v660
      %665 = vst [vmem:[%s251] sm:$0xff] %v661
      %666 = vst [vmem:[%s251 + $0x8] sm:$0xff] %v662
      %667 = vst [vmem:[%s251 + $0x10] sm:$0xff] %v663
      %668 = vst [vmem:[%s251 + $0x18] sm:$0xff] %v664
      %p669 = scmp.lt.s32.totalorder %s17, 1
      %s670 = scalar_select %p669, %s17, 1
      %s671 = smul.addr %s670, 4
      %s672 = smul.addr %s671, 8
      %s673 = scalar_lea.vmem %s6, %s672
      // Predicated region
      $region45: #{light_unit_forward.1} parent=43 // pred_check
        %p674 = pneg %p166
      $region46: #{light_unit_forward.1} parent=43 // pred_check_branch
        %676 = sbr.rel (%p674) target = $region48
      $region47: #{light_unit_forward.1} parent=43 // pred_region
        _
      $region48: #{light_unit_forward.1} parent=43 // pred_fallthru
        _
    $region44: #{light_unit_forward.1} parent=5 // pred_fallthru
      _
    %p677 = scmp.le.s32.totalorder 2, %s12
    // Predicated region
    $region49: #{light_unit_forward.1} parent=5 // pred_check
      %p678 = pneg %p677
    $region50: #{light_unit_forward.1} parent=5 // pred_check_branch
      %680 = sbr.rel (%p678) target = $region52
    $region51: #{light_unit_forward.1} parent=5 // pred_region
      %s681 = ssub.s32 %s12, 2
      // Predicated region
      $region53: #{light_unit_forward.1} parent=51 // pred_check
        %p682 = pneg %p172
      $region54: #{light_unit_forward.1} parent=51 // pred_check_branch
        %684 = sbr.rel (%p682) target = $region56
      $region55: #{light_unit_forward.1} parent=51 // pred_region
        %p685 = scmp.lt.s32.totalorder %s18, 1
        %s686 = scalar_select %p685, %s18, 1
        %s687 = smul.addr %s686, 4
        %s688 = smul.addr %s687, 8
        %s689 = scalar_lea.vmem %s6, %s688
      $region56: #{light_unit_forward.1} parent=51 // pred_fallthru
        _
    $region52: #{light_unit_forward.1} parent=5 // pred_fallthru
      _
  $region6: #{light_unit_forward.1} parent=0 // loop_footer
    %s16 = sadd.s32 1, %s12
  $region7: #{light_unit_forward.1} parent=0 // loop_footer_branch
    %11 = sbr.rel target = $region3
  $region8: #{light_unit_forward.1} parent=0 // loop_exit
    _

</llo_original>
